<compile_context>
chip_gen: v5e
topology: v5e:2x2
jax: 0.10.0
libtpu: 0.0.40
codegen_flags: <defaults>
</compile_context>

<pallas_src>
import functools

import jax
import jax.numpy as jnp
from jax import lax
from jax.experimental import pallas as pl
from jax.experimental.pallas import tpu as pltpu

GAMMA = 0.99
LEAKY_SLOPE = 0.2

_LANE = 128
_SUBLANE = 8


def _leaky_relu(x):
    return jnp.where(x > 0, x, LEAKY_SLOPE * x)


def _round_up(x, m):
    return (x + m - 1) // m * m


def _cdiv(a, b):
    return -(-a // b)


def _pick_batch_tile(B, D, block_b, sub):
    """Largest batch tile that fits the VMEM budget; >=2 tiles for big batches."""
    d_pad = _round_up(max(D, 1), _LANE)
    # Per-row VMEM: obs + obs_n double-buffered input tiles + f32 activations.
    bytes_per_row = 2 * 2 * d_pad * 4 + 16 * 32 * 4
    budget = 28 * 1024 * 1024                      # safe on every generation
    cap = max(sub, (budget // bytes_per_row) // _LANE * _LANE)
    tb = max(sub, min(block_b, cap))
    b8 = _round_up(B, sub)
    if b8 <= tb:
        if B >= 2048:
            # Split large single-tile batches so the "parallel" grid axis can
            # shard across the two v7x TensorCores (no-op on v5e/v6e).
            tb = _round_up(_cdiv(b8, 2), _LANE)
        else:
            tb = b8
    else:
        # Balance the tiles to minimize padding of the last one.
        tb = _round_up(tb, sub)
        align = _LANE if tb >= _LANE else sub
        n = _cdiv(b8, tb)
        tb = min(tb, _round_up(_cdiv(b8, n), align))
    return tb


def _vmem_limit_bytes(tb, D, itemsize):
    d_pad = _round_up(max(D, 1), _LANE)
    tb_lanes = _round_up(tb, _LANE)
    est = (
        2 * 2 * tb * d_pad * itemsize          # obs / obs_n double buffers
        + 2 * 2 * _SUBLANE * tb_lanes * 4      # dones + output double buffers
        + 16 * 32 * tb_lanes * 4               # f32 activation temporaries
        + (1 << 19)                            # resident weights + slack
    )
    return int(min(48 * 1024 * 1024, max(32 * 1024 * 1024, 2 * est)))


def _discriminator_kernel(
    obs_ref, obs_n_ref, dones_ref,          # [tb, D], [tb, D], [1, 1, tb]
    w1t_ref, b1t_ref,                       # fused layer-1 (transposed) [64, D], [64, 1]
    h_w2t_ref, h_b2t_ref,                   # h hidden layer (transposed) [32, 32], [32, 1]
    g_w2t_ref, g_b2_ref,                    # g head [1, 32], [1, 1]
    h_w3t_ref, h_b3_ref,                    # h head [1, 32], [1, 1]
    out_ref,                                # [1, 1, tb]
    *, gamma,
):
    f32 = jnp.float32
    dn_t = (((1,), (1,)), ((), ()))         # contract last dims: [M,K] x [N,K] -> [M,N]

    w1t = w1t_ref[...]                      # [64, D]; rows 0:32 = g_theta, 32:64 = h_phi
    b1t = b1t_ref[...]                      # [64, 1]

    # Layer 1, batch-on-lanes.  obs needs both branches; obs_n only h_phi.
    z1_s = lax.dot_general(w1t, obs_ref[...], dn_t,
                           preferred_element_type=f32) + b1t               # [64, tb]
    z1_sn = lax.dot_general(w1t[32:, :], obs_n_ref[...], dn_t,
                            preferred_element_type=f32) + b1t[32:, :]      # [32, tb]

    g1 = z1_s[:32, :]                        # [32, tb]  (Identity activation)
    h1_s = _leaky_relu(z1_s[32:, :])         # [32, tb]
    h1_sn = _leaky_relu(z1_sn)               # [32, tb]

    # h_phi hidden layer: plain [32,32] @ [32,tb] matmuls (lane-dense).
    h_w2t = h_w2t_ref[...]
    h_b2t = h_b2t_ref[...]
    h2_s = _leaky_relu(jnp.dot(h_w2t, h1_s, preferred_element_type=f32) + h_b2t)
    h2_sn = _leaky_relu(jnp.dot(h_w2t, h1_sn, preferred_element_type=f32) + h_b2t)

    # 32 -> 1 heads: [1,32] @ [32,tb] -> [1, tb]; batch stays on the lane axis.
    g_s = jnp.dot(g_w2t_ref[...], g1, preferred_element_type=f32) + g_b2_ref[...]
    h_s = jnp.dot(h_w3t_ref[...], h2_s, preferred_element_type=f32) + h_b3_ref[...]
    h_sn = jnp.dot(h_w3t_ref[...], h2_sn, preferred_element_type=f32) + h_b3_ref[...]

    dones = dones_ref[0]                     # [1, tb]
    out_ref[0] = g_s + gamma * (1.0 - dones) * h_sn - h_s


def discriminator_forward(obs, obs_n, dones, params, *, gamma=GAMMA, block_b=4096):
    """obs, obs_n: [B, D] (f32 or bf16); dones: [B]. Returns f: [B] float32."""
    B, D = obs.shape
    (g_w1, g_b1, g_w2, g_b2,
     h_w1, h_b1, h_w2, h_b2, h_w3, h_b3) = params

    # Keep bf16 observations as-is (halves HBM traffic); everything else f32.
    in_dtype = jnp.bfloat16 if obs.dtype == jnp.bfloat16 else jnp.float32
    obs = obs.astype(in_dtype)
    obs_n = obs_n.astype(in_dtype)
    dones = dones.astype(jnp.float32).reshape(B)

    sub = 16 if in_dtype == jnp.bfloat16 else _SUBLANE
    tb = _pick_batch_tile(B, D, block_b, sub)
    b_pad = _round_up(B, tb)
    n_tiles = b_pad // tb
    if b_pad != B:
        pad = b_pad - B
        obs = jnp.pad(obs, ((0, pad), (0, 0)))
        obs_n = jnp.pad(obs_n, ((0, pad), (0, 0)))
        dones = jnp.pad(dones, ((0, pad),))
    # dones / output laid out (n_tiles, 1, tb): batch on the lane axis.
    dones3 = dones.reshape(n_tiles, 1, tb)

    # Fuse and pre-transpose weights (tiny one-time wrapper ops):
    #   w1t [64, D]: rows 0:32 = g_theta layer 1, rows 32:64 = h_phi layer 1.
    w1t = jnp.concatenate([g_w1, h_w1], axis=1).T.astype(in_dtype)     # [64, D]
    b1t = jnp.concatenate([g_b1, h_b1], axis=1).T                      # [64, 1]
    h_w2t = h_w2.T                                                     # [32, 32]
    h_b2t = h_b2.T                                                     # [32, 1]
    g_w2t = g_w2.T                                                     # [1, 32]
    h_w3t = h_w3.T                                                     # [1, 32]

    weight_args = (w1t, b1t, h_w2t, h_b2t, g_w2t, g_b2, h_w3t, h_b3)
    weight_specs = [pl.BlockSpec(w.shape, lambda i: (0, 0)) for w in weight_args]

    in_specs = [
        pl.BlockSpec((tb, D), lambda i: (i, 0)),          # obs (batch-tiled)
        pl.BlockSpec((tb, D), lambda i: (i, 0)),          # obs_n (batch-tiled)
        pl.BlockSpec((1, 1, tb), lambda i: (i, 0, 0)),    # dones (lane-dense)
        *weight_specs,
    ]
    out_spec = pl.BlockSpec((1, 1, tb), lambda i: (i, 0, 0))

    # Cost hint so XLA can overlap this small custom call with surrounding ops.
    flops = int(2 * b_pad * (D * 96 + 2 * 32 * 32 + 3 * 32) + 8 * b_pad)
    weight_bytes = int(sum(w.size * w.dtype.itemsize for w in weight_args))
    bytes_accessed = int(2 * b_pad * D * obs.dtype.itemsize + 2 * b_pad * 4 + weight_bytes)
    cost = pl.CostEstimate(flops=flops, transcendentals=0, bytes_accessed=bytes_accessed)

    kernel = functools.partial(_discriminator_kernel, gamma=gamma)
    out = pl.pallas_call(
        kernel,
        out_shape=jax.ShapeDtypeStruct((n_tiles, 1, tb), jnp.float32),
        grid=(n_tiles,),
        in_specs=in_specs,
        out_specs=out_spec,
        compiler_params=pltpu.CompilerParams(
            dimension_semantics=("parallel",),            # v7x: split batch over 2 TCs
            vmem_limit_bytes=_vmem_limit_bytes(tb, D, obs.dtype.itemsize),
        ),
        cost_estimate=cost,
    )(obs, obs_n, dones3, *weight_args)

    return out.reshape(b_pad)[:B]


def init_params(key, obs_dim):
    """Deterministic init mimicking torch.nn.Linear (uniform +/- 1/sqrt(fan_in)).
    Weights stored as [in, out]; biases as [1, out]."""
    def linear(k, fan_in, fan_out):
        kw, kb = jax.random.split(k)
        bound = 1.0 / jnp.sqrt(jnp.float32(fan_in))
        w = jax.random.uniform(kw, (fan_in, fan_out), jnp.float32, -bound, bound)
        b = jax.random.uniform(kb, (1, fan_out), jnp.float32, -bound, bound)
        return w, b

    keys = jax.random.split(key, 5)
    g_w1, g_b1 = linear(keys[0], obs_dim, 32)   # g_theta: obs_dim -> 32 -> 1
    g_w2, g_b2 = linear(keys[1], 32, 1)
    h_w1, h_b1 = linear(keys[2], obs_dim, 32)   # h_phi: obs_dim -> 32 -> 32 -> 1
    h_w2, h_b2 = linear(keys[3], 32, 32)
    h_w3, h_b3 = linear(keys[4], 32, 1)
    return (g_w1, g_b1, g_w2, g_b2, h_w1, h_b1, h_w2, h_b2, h_w3, h_b3)


def discriminator_forward_ref(obs, obs_n, dones, params, gamma=GAMMA):
    """Pure-JAX reference for verification (f32)."""
    (g_w1, g_b1, g_w2, g_b2,
     h_w1, h_b1, h_w2, h_b2, h_w3, h_b3) = params
    obs = obs.astype(jnp.float32)
    obs_n = obs_n.astype(jnp.float32)

    def g(x):
        return (x @ g_w1 + g_b1) @ g_w2 + g_b2

    def h(x):
        a1 = _leaky_relu(x @ h_w1 + h_b1)
        a2 = _leaky_relu(a1 @ h_w2 + h_b2)
        return a2 @ h_w3 + h_b3

    g_s = g(obs)[:, 0]
    return g_s + gamma * (1.0 - dones) * h(obs_n)[:, 0] - h(obs)[:, 0]


if __name__ == "__main__":
    key = jax.random.PRNGKey(0)
    k_obs, k_obsn, k_done, k_params, k2, k3 = jax.random.split(key, 6)

    # Small single-tile case (f32).
    B, OBS_DIM = 8, 16
    obs = jax.random.normal(k_obs, (B, OBS_DIM), jnp.float32)
    obs_n = jax.random.normal(k_obsn, (B, OBS_DIM), jnp.float32)
    dones = (jax.random.uniform(k_done, (B,)) > 0.5).astype(jnp.float32)
    params = init_params(k_params, OBS_DIM)

    f = discriminator_forward(obs, obs_n, dones, params)
    jax.block_until_ready(f)
    f_ref = discriminator_forward_ref(obs, obs_n, dones, params)
    assert f.shape == (B,)
    assert jnp.allclose(f, f_ref, atol=1e-4, rtol=1e-4), (f, f_ref)

    # Multi-tile + padding path (block_b < B forces several grid steps).
    B2 = 40
    ko, kn, kd = jax.random.split(k2, 3)
    obs2 = jax.random.normal(ko, (B2, OBS_DIM), jnp.float32)
    obs_n2 = jax.random.normal(kn, (B2, OBS_DIM), jnp.float32)
    dones2 = (jax.random.uniform(kd, (B2,)) > 0.5).astype(jnp.float32)
    f2 = discriminator_forward(obs2, obs_n2, dones2, params, block_b=16)
    jax.block_until_ready(f2)
    f2_ref = discriminator_forward_ref(obs2, obs_n2, dones2, params)
    assert f2.shape == (B2,)
    assert jnp.allclose(f2, f2_ref, atol=1e-4, rtol=1e-4), (f2, f2_ref)

    # bf16 observation path (halved HBM traffic; f32 accumulation in-kernel).
    B3 = 32
    ko3, kn3, kd3 = jax.random.split(k3, 3)
    obs3 = jax.random.normal(ko3, (B3, OBS_DIM), jnp.float32).astype(jnp.bfloat16)
    obs_n3 = jax.random.normal(kn3, (B3, OBS_DIM), jnp.float32).astype(jnp.bfloat16)
    dones3 = (jax.random.uniform(kd3, (B3,)) > 0.5).astype(jnp.float32)
    f3 = discriminator_forward(obs3, obs_n3, dones3, params)
    jax.block_until_ready(f3)
    f3_ref = discriminator_forward_ref(obs3, obs_n3, dones3, params)
    assert f3.shape == (B3,)
    assert jnp.allclose(f3, f3_ref, atol=7e-2, rtol=7e-2), (f3, f3_ref)

    print("KERNEL_OK")
</pallas_src>

<mosaic_0001>
module attributes {stable_mosaic.version = 11 : i64} {
  func.func @_discriminator_kernel(%arg0: i32, %arg1: memref<8x16xf32, #tpu.memory_space<vmem>>, %arg2: memref<8x16xf32, #tpu.memory_space<vmem>>, %arg3: memref<1x1x8xf32, #tpu.memory_space<vmem>>, %arg4: memref<64x16xf32, #tpu.memory_space<vmem>>, %arg5: memref<64x1xf32, #tpu.memory_space<vmem>>, %arg6: memref<32x32xf32, #tpu.memory_space<vmem>>, %arg7: memref<32x1xf32, #tpu.memory_space<vmem>>, %arg8: memref<1x32xf32, #tpu.memory_space<vmem>>, %arg9: memref<1x1xf32, #tpu.memory_space<vmem>>, %arg10: memref<1x32xf32, #tpu.memory_space<vmem>>, %arg11: memref<1x1xf32, #tpu.memory_space<vmem>>, %arg12: memref<1x1x8xf32, #tpu.memory_space<vmem>>) attributes {dimension_semantics = [#tpu.dimension_semantics<parallel>], iteration_bounds = array<i64: 1>, scalar_prefetch = 0 : i64, scratch_operands = 0 : i64, tpu.core_type = #tpu.core_type<tc>, window_params = [{transform_indices = @transform_0, window_bounds = array<i64: 8, 16>}, {transform_indices = @transform_1, window_bounds = array<i64: 8, 16>}, {transform_indices = @transform_2, window_bounds = array<i64: 1, 1, 8>}, {pipeline_mode = #tpu.pipeline_mode<synchronous>, transform_indices = @transform_3, window_bounds = array<i64: 64, 16>}, {pipeline_mode = #tpu.pipeline_mode<synchronous>, transform_indices = @transform_4, window_bounds = array<i64: 64, 1>}, {pipeline_mode = #tpu.pipeline_mode<synchronous>, transform_indices = @transform_5, window_bounds = array<i64: 32, 32>}, {pipeline_mode = #tpu.pipeline_mode<synchronous>, transform_indices = @transform_6, window_bounds = array<i64: 32, 1>}, {pipeline_mode = #tpu.pipeline_mode<synchronous>, transform_indices = @transform_7, window_bounds = array<i64: 1, 32>}, {pipeline_mode = #tpu.pipeline_mode<synchronous>, transform_indices = @transform_8, window_bounds = array<i64: 1, 1>}, {pipeline_mode = #tpu.pipeline_mode<synchronous>, transform_indices = @transform_9, window_bounds = array<i64: 1, 32>}, {pipeline_mode = #tpu.pipeline_mode<synchronous>, transform_indices = @transform_10, window_bounds = array<i64: 1, 1>}, {transform_indices = @transform_11, window_bounds = array<i64: 1, 1, 8>}]} {
    %c0 = arith.constant 0 : index
    %c0_0 = arith.constant 0 : index
    %0 = vector.load %arg4[%c0, %c0_0] : memref<64x16xf32, #tpu.memory_space<vmem>>, vector<64x16xf32>
    %c0_1 = arith.constant 0 : index
    %c0_2 = arith.constant 0 : index
    %1 = vector.load %arg5[%c0_1, %c0_2] : memref<64x1xf32, #tpu.memory_space<vmem>>, vector<64x1xf32>
    %c0_3 = arith.constant 0 : index
    %c0_4 = arith.constant 0 : index
    %2 = vector.load %arg1[%c0_3, %c0_4] : memref<8x16xf32, #tpu.memory_space<vmem>>, vector<8x16xf32>
    %cst = arith.constant dense<0.000000e+00> : vector<64x8xf32>
    %3 = tpu.matmul %0, %2, %cst {dimension_numbers = #tpu.dot_dimension_numbers<[1], [1], [0], [0], [0, 0, 1, 0], [], []>} : vector<64x16xf32>, vector<8x16xf32>, vector<64x8xf32> -> vector<64x8xf32>
    %4 = vector.broadcast %1 : vector<64x1xf32> to vector<64x8xf32>
    %5 = arith.addf %3, %4 : vector<64x8xf32>
    %6 = vector.extract_strided_slice %0 {offsets = [32, 0], sizes = [32, 16], strides = [1, 1]} : vector<64x16xf32> to vector<32x16xf32>
    %c0_5 = arith.constant 0 : index
    %c0_6 = arith.constant 0 : index
    %7 = vector.load %arg2[%c0_5, %c0_6] : memref<8x16xf32, #tpu.memory_space<vmem>>, vector<8x16xf32>
    %cst_7 = arith.constant dense<0.000000e+00> : vector<32x8xf32>
    %8 = tpu.matmul %6, %7, %cst_7 {dimension_numbers = #tpu.dot_dimension_numbers<[1], [1], [0], [0], [0, 0, 1, 0], [], []>} : vector<32x16xf32>, vector<8x16xf32>, vector<32x8xf32> -> vector<32x8xf32>
    %9 = vector.extract_strided_slice %1 {offsets = [32, 0], sizes = [32, 1], strides = [1, 1]} : vector<64x1xf32> to vector<32x1xf32>
    %10 = vector.broadcast %9 : vector<32x1xf32> to vector<32x8xf32>
    %11 = arith.addf %8, %10 : vector<32x8xf32>
    %12 = vector.extract_strided_slice %5 {offsets = [0, 0], sizes = [32, 8], strides = [1, 1]} : vector<64x8xf32> to vector<32x8xf32>
    %13 = vector.extract_strided_slice %5 {offsets = [32, 0], sizes = [32, 8], strides = [1, 1]} : vector<64x8xf32> to vector<32x8xf32>
    %cst_8 = arith.constant 0.000000e+00 : f32
    %14 = vector.broadcast %cst_8 : f32 to vector<32x8xf32>
    %15 = arith.cmpf ogt, %13, %14 : vector<32x8xf32>
    %cst_9 = arith.constant 2.000000e-01 : f32
    %16 = vector.broadcast %cst_9 : f32 to vector<32x8xf32>
    %17 = arith.mulf %16, %13 : vector<32x8xf32>
    %18 = arith.select %15, %13, %17 : vector<32x8xi1>, vector<32x8xf32>
    %cst_10 = arith.constant 0.000000e+00 : f32
    %19 = vector.broadcast %cst_10 : f32 to vector<32x8xf32>
    %20 = arith.cmpf ogt, %11, %19 : vector<32x8xf32>
    %cst_11 = arith.constant 2.000000e-01 : f32
    %21 = vector.broadcast %cst_11 : f32 to vector<32x8xf32>
    %22 = arith.mulf %21, %11 : vector<32x8xf32>
    %23 = arith.select %20, %11, %22 : vector<32x8xi1>, vector<32x8xf32>
    %c0_12 = arith.constant 0 : index
    %c0_13 = arith.constant 0 : index
    %24 = vector.load %arg6[%c0_12, %c0_13] : memref<32x32xf32, #tpu.memory_space<vmem>>, vector<32x32xf32>
    %c0_14 = arith.constant 0 : index
    %c0_15 = arith.constant 0 : index
    %25 = vector.load %arg7[%c0_14, %c0_15] : memref<32x1xf32, #tpu.memory_space<vmem>>, vector<32x1xf32>
    %cst_16 = arith.constant dense<0.000000e+00> : vector<32x8xf32>
    %26 = tpu.matmul %24, %18, %cst_16 {dimension_numbers = #tpu.dot_dimension_numbers<[1], [0], [0], [1], [0, 0, 1, 1], [], []>} : vector<32x32xf32>, vector<32x8xf32>, vector<32x8xf32> -> vector<32x8xf32>
    %27 = vector.broadcast %25 : vector<32x1xf32> to vector<32x8xf32>
    %28 = arith.addf %26, %27 : vector<32x8xf32>
    %cst_17 = arith.constant 0.000000e+00 : f32
    %29 = vector.broadcast %cst_17 : f32 to vector<32x8xf32>
    %30 = arith.cmpf ogt, %28, %29 : vector<32x8xf32>
    %cst_18 = arith.constant 2.000000e-01 : f32
    %31 = vector.broadcast %cst_18 : f32 to vector<32x8xf32>
    %32 = arith.mulf %31, %28 : vector<32x8xf32>
    %33 = arith.select %30, %28, %32 : vector<32x8xi1>, vector<32x8xf32>
    %cst_19 = arith.constant dense<0.000000e+00> : vector<32x8xf32>
    %34 = tpu.matmul %24, %23, %cst_19 {dimension_numbers = #tpu.dot_dimension_numbers<[1], [0], [0], [1], [0, 0, 1, 1], [], []>} : vector<32x32xf32>, vector<32x8xf32>, vector<32x8xf32> -> vector<32x8xf32>
    %35 = vector.broadcast %25 : vector<32x1xf32> to vector<32x8xf32>
    %36 = arith.addf %34, %35 : vector<32x8xf32>
    %cst_20 = arith.constant 0.000000e+00 : f32
    %37 = vector.broadcast %cst_20 : f32 to vector<32x8xf32>
    %38 = arith.cmpf ogt, %36, %37 : vector<32x8xf32>
    %cst_21 = arith.constant 2.000000e-01 : f32
    %39 = vector.broadcast %cst_21 : f32 to vector<32x8xf32>
    %40 = arith.mulf %39, %36 : vector<32x8xf32>
    %41 = arith.select %38, %36, %40 : vector<32x8xi1>, vector<32x8xf32>
    %c0_22 = arith.constant 0 : index
    %c0_23 = arith.constant 0 : index
    %42 = vector.load %arg8[%c0_22, %c0_23] : memref<1x32xf32, #tpu.memory_space<vmem>>, vector<1x32xf32>
    %cst_24 = arith.constant dense<0.000000e+00> : vector<1x8xf32>
    %43 = tpu.matmul %42, %12, %cst_24 {dimension_numbers = #tpu.dot_dimension_numbers<[1], [0], [0], [1], [0, 0, 1, 1], [], []>} : vector<1x32xf32>, vector<32x8xf32>, vector<1x8xf32> -> vector<1x8xf32>
    %c0_25 = arith.constant 0 : index
    %c0_26 = arith.constant 0 : index
    %44 = vector.load %arg9[%c0_25, %c0_26] : memref<1x1xf32, #tpu.memory_space<vmem>>, vector<1x1xf32>
    %45 = vector.broadcast %44 : vector<1x1xf32> to vector<1x8xf32>
    %46 = arith.addf %43, %45 : vector<1x8xf32>
    %c0_27 = arith.constant 0 : index
    %c0_28 = arith.constant 0 : index
    %47 = vector.load %arg10[%c0_27, %c0_28] : memref<1x32xf32, #tpu.memory_space<vmem>>, vector<1x32xf32>
    %cst_29 = arith.constant dense<0.000000e+00> : vector<1x8xf32>
    %48 = tpu.matmul %47, %33, %cst_29 {dimension_numbers = #tpu.dot_dimension_numbers<[1], [0], [0], [1], [0, 0, 1, 1], [], []>} : vector<1x32xf32>, vector<32x8xf32>, vector<1x8xf32> -> vector<1x8xf32>
    %c0_30 = arith.constant 0 : index
    %c0_31 = arith.constant 0 : index
    %49 = vector.load %arg11[%c0_30, %c0_31] : memref<1x1xf32, #tpu.memory_space<vmem>>, vector<1x1xf32>
    %50 = vector.broadcast %49 : vector<1x1xf32> to vector<1x8xf32>
    %51 = arith.addf %48, %50 : vector<1x8xf32>
    %c0_32 = arith.constant 0 : index
    %c0_33 = arith.constant 0 : index
    %52 = vector.load %arg10[%c0_32, %c0_33] : memref<1x32xf32, #tpu.memory_space<vmem>>, vector<1x32xf32>
    %cst_34 = arith.constant dense<0.000000e+00> : vector<1x8xf32>
    %53 = tpu.matmul %52, %41, %cst_34 {dimension_numbers = #tpu.dot_dimension_numbers<[1], [0], [0], [1], [0, 0, 1, 1], [], []>} : vector<1x32xf32>, vector<32x8xf32>, vector<1x8xf32> -> vector<1x8xf32>
    %c0_35 = arith.constant 0 : index
    %c0_36 = arith.constant 0 : index
    %54 = vector.load %arg11[%c0_35, %c0_36] : memref<1x1xf32, #tpu.memory_space<vmem>>, vector<1x1xf32>
    %55 = vector.broadcast %54 : vector<1x1xf32> to vector<1x8xf32>
    %56 = arith.addf %53, %55 : vector<1x8xf32>
    %c0_37 = arith.constant 0 : index
    %c0_38 = arith.constant 0 : index
    %c0_39 = arith.constant 0 : index
    %57 = vector.load %arg3[%c0_37, %c0_38, %c0_39] : memref<1x1x8xf32, #tpu.memory_space<vmem>>, vector<1x1x8xf32>
    %58 = vector.shape_cast %57 : vector<1x1x8xf32> to vector<1x8xf32>
    %cst_40 = arith.constant 1.000000e+00 : f32
    %59 = vector.broadcast %cst_40 : f32 to vector<1x8xf32>
    %60 = arith.subf %59, %58 : vector<1x8xf32>
    %cst_41 = arith.constant 9.900000e-01 : f32
    %61 = vector.broadcast %cst_41 : f32 to vector<1x8xf32>
    %62 = arith.mulf %61, %60 : vector<1x8xf32>
    %63 = arith.mulf %62, %56 : vector<1x8xf32>
    %64 = arith.addf %46, %63 : vector<1x8xf32>
    %65 = arith.subf %64, %51 : vector<1x8xf32>
    %c0_42 = arith.constant 0 : index
    %c0_43 = arith.constant 0 : index
    %c0_44 = arith.constant 0 : index
    %66 = vector.load %arg12[%c0_42, %c0_43, %c0_44] : memref<1x1x8xf32, #tpu.memory_space<vmem>>, vector<1x1x8xf32>
    %67 = vector.shape_cast %66 : vector<1x1x8xf32> to vector<1x8xf32>
    %68 = vector.shape_cast %65 : vector<1x8xf32> to vector<1x1x8xf32>
    tpu.vector_store %arg12[%c0_42, %c0_43, %c0_44], %68 {strides = array<i32>} : memref<1x1x8xf32, #tpu.memory_space<vmem>>, vector<1x1x8xf32>,
    return
  }
  func.func @transform_0(%arg0: i32) -> (i32, i32) {
    %c0_i32 = arith.constant 0 : i32
    %c0_i32_0 = arith.constant 0 : i32
    return %arg0, %c0_i32 : i32, i32
  }
  func.func @transform_1(%arg0: i32) -> (i32, i32) {
    %c0_i32 = arith.constant 0 : i32
    %c0_i32_0 = arith.constant 0 : i32
    return %arg0, %c0_i32 : i32, i32
  }
  func.func @transform_2(%arg0: i32) -> (i32, i32, i32) {
    %c0_i32 = arith.constant 0 : i32
    %c0_i32_0 = arith.constant 0 : i32
    %c0_i32_1 = arith.constant 0 : i32
    return %arg0, %c0_i32, %c0_i32_0 : i32, i32, i32
  }
  func.func @transform_3(%arg0: i32) -> (i32, i32) {
    %c0_i32 = arith.constant 0 : i32
    %c0_i32_0 = arith.constant 0 : i32
    %c0_i32_1 = arith.constant 0 : i32
    return %c0_i32, %c0_i32_0 : i32, i32
  }
  func.func @transform_4(%arg0: i32) -> (i32, i32) {
    %c0_i32 = arith.constant 0 : i32
    %c0_i32_0 = arith.constant 0 : i32
    %c0_i32_1 = arith.constant 0 : i32
    return %c0_i32, %c0_i32_0 : i32, i32
  }
  func.func @transform_5(%arg0: i32) -> (i32, i32) {
    %c0_i32 = arith.constant 0 : i32
    %c0_i32_0 = arith.constant 0 : i32
    %c0_i32_1 = arith.constant 0 : i32
    return %c0_i32, %c0_i32_0 : i32, i32
  }
  func.func @transform_6(%arg0: i32) -> (i32, i32) {
    %c0_i32 = arith.constant 0 : i32
    %c0_i32_0 = arith.constant 0 : i32
    %c0_i32_1 = arith.constant 0 : i32
    return %c0_i32, %c0_i32_0 : i32, i32
  }
  func.func @transform_7(%arg0: i32) -> (i32, i32) {
    %c0_i32 = arith.constant 0 : i32
    %c0_i32_0 = arith.constant 0 : i32
    %c0_i32_1 = arith.constant 0 : i32
    return %c0_i32, %c0_i32_0 : i32, i32
  }
  func.func @transform_8(%arg0: i32) -> (i32, i32) {
    %c0_i32 = arith.constant 0 : i32
    %c0_i32_0 = arith.constant 0 : i32
    %c0_i32_1 = arith.constant 0 : i32
    return %c0_i32, %c0_i32_0 : i32, i32
  }
  func.func @transform_9(%arg0: i32) -> (i32, i32) {
    %c0_i32 = arith.constant 0 : i32
    %c0_i32_0 = arith.constant 0 : i32
    %c0_i32_1 = arith.constant 0 : i32
    return %c0_i32, %c0_i32_0 : i32, i32
  }
  func.func @transform_10(%arg0: i32) -> (i32, i32) {
    %c0_i32 = arith.constant 0 : i32
    %c0_i32_0 = arith.constant 0 : i32
    %c0_i32_1 = arith.constant 0 : i32
    return %c0_i32, %c0_i32_0 : i32, i32
  }
  func.func @transform_11(%arg0: i32) -> (i32, i32, i32) {
    %c0_i32 = arith.constant 0 : i32
    %c0_i32_0 = arith.constant 0 : i32
    %c0_i32_1 = arith.constant 0 : i32
    return %arg0, %c0_i32, %c0_i32_0 : i32, i32, i32
  }
}

</mosaic_0001>

<llo_original>
// kernel: tpu_custom_call.1
$region0: #{tpu_custom_call.1}
  #allocation0 [shape = 'u32[]', space=smem, size = 0x4, offset = 0x4, fixed_abs, tag = 'smem constant byte address 0x4 - core index']
  #allocation1 [shape = 'u32[72,128]{1,0:T(1,128)}', space=vmem, size = 0x9000, scoped, tag = 'internal scratch']
  #allocation2 [shape = 'f32[1,1]{1,0:T(1,128)S(1)}', space=vmem, size = 0x200, scoped, tag = 'scoped memory for tpu_custom_call.1']
  #allocation3 [shape = 'f32[1,1]{1,0:T(1,128)S(1)}', space=vmem, size = 0x200, scoped, tag = 'scoped memory for tpu_custom_call.1']
  %s0 = inlined_call_operand.vmem [shape: f32[8,16], index: 0, kind: input, shape index: {}]
  %s1 = inlined_call_operand.vmem [shape: f32[8,16], index: 1, kind: input, shape index: {}]
  %s2 = inlined_call_operand.vmem [shape: f32[1,1,8], index: 2, kind: input, shape index: {}]
  %s3 = inlined_call_operand.vmem [shape: f32[64,16], index: 3, kind: input, shape index: {}]
  %s4 = inlined_call_operand.vmem [shape: f32[64,1], index: 4, kind: input, shape index: {}]
  %s5 = inlined_call_operand.vmem [shape: f32[32,32], index: 5, kind: input, shape index: {}]
  %s6 = inlined_call_operand.vmem [shape: f32[32,1], index: 6, kind: input, shape index: {}]
  %s7 = inlined_call_operand.vmem [shape: f32[1,32], index: 7, kind: input, shape index: {}]
  %s8 = inlined_call_operand.<no memory space> [shape: f32[1,1], index: 8, kind: input, shape index: {}]
  %s9 = inlined_call_operand.vmem [shape: f32[1,32], index: 9, kind: input, shape index: {}]
  %s10 = inlined_call_operand.<no memory space> [shape: f32[1,1], index: 10, kind: input, shape index: {}]
  %s11 = inlined_call_operand.hbm [shape: f32[1,1,8], index: 11, kind: output, shape index: {}]
  %s12 = sld [smem:[#allocation0]]
  $region54: #{tpu_custom_call.1} parent=0
    _
  %s14 = ssub.s32 1, %s12
  %s15 = scalar_select 0, %s14, %s12
  %v16 = vstv %s8
  %17 = vst [vmem:[#allocation2] sm:$0x1] %v16
  %v18 = vstv %s10
  %19 = vst [vmem:[#allocation3] sm:$0x1] %v18
  $region1: #{tpu_custom_call.1} parent=0
    #allocation4 [shape = 'u8[512]{0}', space=vmem, size = 0x400, scoped, tag = 'output window, operand 0, single buffered']
    #allocation5 [shape = 's32[1]{0}', space=sflag, size = 0x4, scoped, tag = 'scoped memory for tpu_custom_call.1']
    %20 = vsyncpa [#allocation5], 0
    // Predicated region
    $region2: #{tpu_custom_call.1} parent=1 // pred_check
      _
    $region3: #{tpu_custom_call.1} parent=1 // pred_check_branch
      %22 = sbr.rel (0) target = $region5
    $region4: #{tpu_custom_call.1} parent=1 // pred_region
      _
    $region5: #{tpu_custom_call.1} parent=1 // pred_fallthru
      _
    // Predicated region
    $region6: #{tpu_custom_call.1} parent=1 // pred_check
      _
    $region7: #{tpu_custom_call.1} parent=1 // pred_check_branch
      %24 = sbr.rel (0) target = $region9
    $region8: #{tpu_custom_call.1} parent=1 // pred_region
      _
    $region9: #{tpu_custom_call.1} parent=1 // pred_fallthru
      _
    // Predicated region
    $region10: #{tpu_custom_call.1} parent=1 // pred_check
      _
    $region11: #{tpu_custom_call.1} parent=1 // pred_check_branch
      %26 = sbr.rel (0) target = $region13
    $region12: #{tpu_custom_call.1} parent=1 // pred_region
      _
    $region13: #{tpu_custom_call.1} parent=1 // pred_fallthru
      _
    // Predicated region
    $region14: #{tpu_custom_call.1} parent=1 // pred_check
      _
    $region15: #{tpu_custom_call.1} parent=1 // pred_check_branch
      %28 = sbr.rel (0) target = $region17
    $region16: #{tpu_custom_call.1} parent=1 // pred_region
      _
    $region17: #{tpu_custom_call.1} parent=1 // pred_fallthru
      _
    // Predicated region
    $region18: #{tpu_custom_call.1} parent=1 // pred_check
      _
    $region19: #{tpu_custom_call.1} parent=1 // pred_check_branch
      %30 = sbr.rel (0) target = $region21
    $region20: #{tpu_custom_call.1} parent=1 // pred_region
      _
    $region21: #{tpu_custom_call.1} parent=1 // pred_fallthru
      _
    // Predicated region
    $region22: #{tpu_custom_call.1} parent=1 // pred_check
      _
    $region23: #{tpu_custom_call.1} parent=1 // pred_check_branch
      %32 = sbr.rel (0) target = $region25
    $region24: #{tpu_custom_call.1} parent=1 // pred_region
      _
    $region25: #{tpu_custom_call.1} parent=1 // pred_fallthru
      _
    // Predicated region
    $region26: #{tpu_custom_call.1} parent=1 // pred_check
      _
    $region27: #{tpu_custom_call.1} parent=1 // pred_check_branch
      %34 = sbr.rel (0) target = $region29
    $region28: #{tpu_custom_call.1} parent=1 // pred_region
      _
    $region29: #{tpu_custom_call.1} parent=1 // pred_fallthru
      _
    // Predicated region
    $region30: #{tpu_custom_call.1} parent=1 // pred_check
      _
    $region31: #{tpu_custom_call.1} parent=1 // pred_check_branch
      %36 = sbr.rel (0) target = $region33
    $region32: #{tpu_custom_call.1} parent=1 // pred_region
      _
    $region33: #{tpu_custom_call.1} parent=1 // pred_fallthru
      _
    // Predicated region
    $region34: #{tpu_custom_call.1} parent=1 // pred_check
      _
    $region35: #{tpu_custom_call.1} parent=1 // pred_check_branch
      %38 = sbr.rel (0) target = $region37
    $region36: #{tpu_custom_call.1} parent=1 // pred_region
      _
    $region37: #{tpu_custom_call.1} parent=1 // pred_fallthru
      _
    // Predicated region
    $region38: #{tpu_custom_call.1} parent=1 // pred_check
      _
    $region39: #{tpu_custom_call.1} parent=1 // pred_check_branch
      %40 = sbr.rel (0) target = $region41
    $region40: #{tpu_custom_call.1} parent=1 // pred_region
      _
    $region41: #{tpu_custom_call.1} parent=1 // pred_fallthru
      _
    // Predicated region
    $region42: #{tpu_custom_call.1} parent=1 // pred_check
      _
    $region43: #{tpu_custom_call.1} parent=1 // pred_check_branch
      %42 = sbr.rel (0) target = $region45
    $region44: #{tpu_custom_call.1} parent=1 // pred_region
      _
    $region45: #{tpu_custom_call.1} parent=1 // pred_fallthru
      _
    %v43 = vld [vmem:[%s3] sm:$0xff]
    %v44 = vld [vmem:[%s3 + $0x8] sm:$0xff]
    %v45 = vld [vmem:[%s3 + $0x10] sm:$0xff]
    %v46 = vld [vmem:[%s3 + $0x18] sm:$0xff]
    %v47 = vld [vmem:[%s3 + $0x20] sm:$0xff]
    %v48 = vld [vmem:[%s3 + $0x28] sm:$0xff]
    %v49 = vld [vmem:[%s3 + $0x30] sm:$0xff]
    %v50 = vld [vmem:[%s3 + $0x38] sm:$0xff]
    %v51 = vld [vmem:[%s4] sm:$0xff]
    %v52 = vld [vmem:[%s4 + $0x8] sm:$0xff]
    %v53 = vld [vmem:[%s4 + $0x10] sm:$0xff]
    %v54 = vld [vmem:[%s4 + $0x18] sm:$0xff]
    %v55 = vld [vmem:[%s4 + $0x20] sm:$0xff]
    %v56 = vld [vmem:[%s4 + $0x28] sm:$0xff]
    %v57 = vld [vmem:[%s4 + $0x30] sm:$0xff]
    %v58 = vld [vmem:[%s4 + $0x38] sm:$0xff]
    %v59 = vld [vmem:[%s0] sm:$0xff]
    %61 = vset.pattern.permute.xlu0 0
    %62 = vperm.xlu0 %61, %v51
    %v63 = vpop.permute.xlu0 %62
    %66 = vset.pattern.permute.xlu0 0
    %67 = vperm.xlu0 %66, %v52
    %v68 = vpop.permute.xlu0 %67
    %71 = vset.pattern.permute.xlu0 0
    %72 = vperm.xlu0 %71, %v53
    %v73 = vpop.permute.xlu0 %72
    %76 = vset.pattern.permute.xlu0 0
    %77 = vperm.xlu0 %76, %v54
    %v78 = vpop.permute.xlu0 %77
    %81 = vset.pattern.permute.xlu0 0
    %82 = vperm.xlu0 %81, %v55
    %v83 = vpop.permute.xlu0 %82
    %86 = vset.pattern.permute.xlu0 0
    %87 = vperm.xlu0 %86, %v56
    %v88 = vpop.permute.xlu0 %87
    %91 = vset.pattern.permute.xlu0 0
    %92 = vperm.xlu0 %91, %v57
    %v93 = vpop.permute.xlu0 %92
    %96 = vset.pattern.permute.xlu0 0
    %97 = vperm.xlu0 %96, %v58
    %v98 = vpop.permute.xlu0 %97
    %vm100 = vcmask 130048
    %v102 = vsel %vm100, %v43, 0
    %v105 = vsel %vm100, %v44, 0
    %v108 = vsel %vm100, %v45, 0
    %v111 = vsel %vm100, %v46, 0
    %v114 = vsel %vm100, %v47, 0
    %v117 = vsel %vm100, %v48, 0
    %v120 = vsel %vm100, %v49, 0
    %v123 = vsel %vm100, %v50, 0
    %v126 = vsel %vm100, %v59, 0
    %128 = vmatpush.xpose.msra.mxu0 0.0
    %129 = vmatpush.xpose.msra.mxu0 0.0
    %130 = vmatpush.xpose.msra.mxu0 0.0
    %131 = vmatpush.xpose.msra.mxu0 0.0
    %132 = vmatpush.xpose.msra.mxu0 0.0
    %133 = vmatpush.xpose.msra.mxu0 0.0
    %134 = vmatpush.xpose.msra.mxu0 0.0
    %135 = vmatpush.xpose.msra.mxu0 0.0
    %136 = vmatpush.xpose.msra.mxu0 0.0
    %137 = vmatpush.xpose.msra.mxu0 0.0
    %138 = vmatpush.xpose.msra.mxu0 0.0
    %139 = vmatpush.xpose.msra.mxu0 0.0
    %140 = vmatpush.xpose.msra.mxu0 0.0
    %141 = vmatpush.xpose.msra.mxu0 0.0
    %142 = vmatpush.xpose.msra.mxu0 0.0
    %143 = vmatpush.xpose.msra.mxu0 %v126
    %144 = vmatmul.f32.gmra.mxu0 %v102
    %v145 = vpop.f32.mrf.mxu0
    %v146 = vadd.f32 %v63, %v145
    %147 = vmatmul.f32.gmra.mxu0 %v105
    %v148 = vpop.f32.mrf.mxu0
    %v149 = vadd.f32 %v68, %v148
    %150 = vmatmul.f32.gmra.mxu0 %v108
    %v151 = vpop.f32.mrf.mxu0
    %v152 = vadd.f32 %v73, %v151
    %153 = vmatmul.f32.gmra.mxu0 %v111
    %v154 = vpop.f32.mrf.mxu0
    %v155 = vadd.f32 %v78, %v154
    %156 = vmatmul.f32.gmra.mxu0 %v114
    %v157 = vpop.f32.mrf.mxu0
    %v158 = vadd.f32 %v83, %v157
    %159 = vmatmul.f32.gmra.mxu0 %v117
    %v160 = vpop.f32.mrf.mxu0
    %v161 = vadd.f32 %v88, %v160
    %162 = vmatmul.f32.gmra.mxu0 %v120
    %v163 = vpop.f32.mrf.mxu0
    %v164 = vadd.f32 %v93, %v163
    %165 = vmatmul.f32.gmra.mxu0 %v123
    %v166 = vpop.f32.mrf.mxu0
    %v167 = vadd.f32 %v98, %v166
    %168 = vdwg.mxu0
    %v169 = vld [vmem:[%s1] sm:$0xff]
    %v171 = vsel %vm100, %v169, 0
    %173 = vmatpush.xpose.msra.mxu0 0.0
    %174 = vmatpush.xpose.msra.mxu0 0.0
    %175 = vmatpush.xpose.msra.mxu0 0.0
    %176 = vmatpush.xpose.msra.mxu0 0.0
    %177 = vmatpush.xpose.msra.mxu0 0.0
    %178 = vmatpush.xpose.msra.mxu0 0.0
    %179 = vmatpush.xpose.msra.mxu0 0.0
    %180 = vmatpush.xpose.msra.mxu0 0.0
    %181 = vmatpush.xpose.msra.mxu0 0.0
    %182 = vmatpush.xpose.msra.mxu0 0.0
    %183 = vmatpush.xpose.msra.mxu0 0.0
    %184 = vmatpush.xpose.msra.mxu0 0.0
    %185 = vmatpush.xpose.msra.mxu0 0.0
    %186 = vmatpush.xpose.msra.mxu0 0.0
    %187 = vmatpush.xpose.msra.mxu0 0.0
    %188 = vmatpush.xpose.msra.mxu0 %v171
    %189 = vmatmul.f32.gmra.mxu0 %v114
    %v190 = vpop.f32.mrf.mxu0
    %v191 = vadd.f32 %v83, %v190
    %192 = vmatmul.f32.gmra.mxu0 %v117
    %v193 = vpop.f32.mrf.mxu0
    %v194 = vadd.f32 %v88, %v193
    %195 = vmatmul.f32.gmra.mxu0 %v120
    %v196 = vpop.f32.mrf.mxu0
    %v197 = vadd.f32 %v93, %v196
    %198 = vmatmul.f32.gmra.mxu0 %v123
    %v199 = vpop.f32.mrf.mxu0
    %v200 = vadd.f32 %v98, %v199
    %201 = vdwg.mxu0
    %vm202 = vcmp.gt.f32.partialorder %v158, 0.0
    %vm203 = vcmp.gt.f32.partialorder %v161, 0.0
    %vm204 = vcmp.gt.f32.partialorder %v164, 0.0
    %vm205 = vcmp.gt.f32.partialorder %v167, 0.0
    %v206 = vmul.f32 %v158, 0.2
    %v207 = vmul.f32 %v161, 0.2
    %v208 = vmul.f32 %v164, 0.2
    %v209 = vmul.f32 %v167, 0.2
    %v210 = vsel %vm202, %v158, %v206
    %v211 = vsel %vm203, %v161, %v207
    %v212 = vsel %vm204, %v164, %v208
    %v213 = vsel %vm205, %v167, %v209
    %vm214 = vcmp.gt.f32.partialorder %v191, 0.0
    %vm215 = vcmp.gt.f32.partialorder %v194, 0.0
    %vm216 = vcmp.gt.f32.partialorder %v197, 0.0
    %vm217 = vcmp.gt.f32.partialorder %v200, 0.0
    %v218 = vmul.f32 %v191, 0.2
    %v219 = vmul.f32 %v194, 0.2
    %v220 = vmul.f32 %v197, 0.2
    %v221 = vmul.f32 %v200, 0.2
    %v222 = vsel %vm214, %v191, %v218
    %v223 = vsel %vm215, %v194, %v219
    %v224 = vsel %vm216, %v197, %v220
    %v225 = vsel %vm217, %v200, %v221
    %v226 = vld [vmem:[%s5] sm:$0xff]
    %v227 = vld [vmem:[%s5 + $0x8] sm:$0xff]
    %v228 = vld [vmem:[%s5 + $0x10] sm:$0xff]
    %v229 = vld [vmem:[%s5 + $0x18] sm:$0xff]
    %v230 = vld [vmem:[%s6] sm:$0xff]
    %v231 = vld [vmem:[%s6 + $0x8] sm:$0xff]
    %v232 = vld [vmem:[%s6 + $0x10] sm:$0xff]
    %v233 = vld [vmem:[%s6 + $0x18] sm:$0xff]
    %235 = vset.pattern.permute.xlu0 0
    %236 = vperm.xlu0 %235, %v230
    %v237 = vpop.permute.xlu0 %236
    %240 = vset.pattern.permute.xlu0 0
    %241 = vperm.xlu0 %240, %v231
    %v242 = vpop.permute.xlu0 %241
    %245 = vset.pattern.permute.xlu0 0
    %246 = vperm.xlu0 %245, %v232
    %v247 = vpop.permute.xlu0 %246
    %250 = vset.pattern.permute.xlu0 0
    %251 = vperm.xlu0 %250, %v233
    %v252 = vpop.permute.xlu0 %251
    %vm254 = vcmask 261120
    %v256 = vsel %vm254, %v226, 0
    %v259 = vsel %vm254, %v227, 0
    %v262 = vsel %vm254, %v228, 0
    %v265 = vsel %vm254, %v229, 0
    %267 = vmatpush.msra.mxu0 0.0
    %268 = vmatpush.msra.mxu0 0.0
    %269 = vmatpush.msra.mxu0 0.0
    %270 = vmatpush.msra.mxu0 0.0
    %271 = vmatpush.msra.mxu0 0.0
    %272 = vmatpush.msra.mxu0 0.0
    %273 = vmatpush.msra.mxu0 0.0
    %274 = vmatpush.msra.mxu0 0.0
    %275 = vmatpush.msra.mxu0 0.0
    %276 = vmatpush.msra.mxu0 0.0
    %277 = vmatpush.msra.mxu0 0.0
    %278 = vmatpush.msra.mxu0 0.0
    %279 = vmatpush.msra.mxu0 %v213
    %280 = vmatpush.msra.mxu0 %v212
    %281 = vmatpush.msra.mxu0 %v211
    %282 = vmatpush.msra.mxu0 %v210
    %283 = vmatmul.f32.gmra.mxu0 %v256
    %v284 = vpop.f32.mrf.mxu0
    %v285 = vadd.f32 %v237, %v284
    %286 = vmatmul.f32.gmra.mxu0 %v259
    %v287 = vpop.f32.mrf.mxu0
    %v288 = vadd.f32 %v242, %v287
    %289 = vmatmul.f32.gmra.mxu0 %v262
    %v290 = vpop.f32.mrf.mxu0
    %v291 = vadd.f32 %v247, %v290
    %292 = vmatmul.f32.gmra.mxu0 %v265
    %v293 = vpop.f32.mrf.mxu0
    %v294 = vadd.f32 %v252, %v293
    %295 = vdwg.mxu0
    %vm296 = vcmp.gt.f32.partialorder %v285, 0.0
    %vm297 = vcmp.gt.f32.partialorder %v288, 0.0
    %vm298 = vcmp.gt.f32.partialorder %v291, 0.0
    %vm299 = vcmp.gt.f32.partialorder %v294, 0.0
    %v300 = vmul.f32 %v285, 0.2
    %v301 = vmul.f32 %v288, 0.2
    %v302 = vmul.f32 %v291, 0.2
    %v303 = vmul.f32 %v294, 0.2
    %v304 = vsel %vm296, %v285, %v300
    %v305 = vsel %vm297, %v288, %v301
    %v306 = vsel %vm298, %v291, %v302
    %v307 = vsel %vm299, %v294, %v303
    %308 = vmatpush.msra.mxu0 0.0
    %309 = vmatpush.msra.mxu0 0.0
    %310 = vmatpush.msra.mxu0 0.0
    %311 = vmatpush.msra.mxu0 0.0
    %312 = vmatpush.msra.mxu0 0.0
    %313 = vmatpush.msra.mxu0 0.0
    %314 = vmatpush.msra.mxu0 0.0
    %315 = vmatpush.msra.mxu0 0.0
    %316 = vmatpush.msra.mxu0 0.0
    %317 = vmatpush.msra.mxu0 0.0
    %318 = vmatpush.msra.mxu0 0.0
    %319 = vmatpush.msra.mxu0 0.0
    %320 = vmatpush.msra.mxu0 %v225
    %321 = vmatpush.msra.mxu0 %v224
    %322 = vmatpush.msra.mxu0 %v223
    %323 = vmatpush.msra.mxu0 %v222
    %324 = vmatmul.f32.gmra.mxu0 %v256
    %v325 = vpop.f32.mrf.mxu0
    %v326 = vadd.f32 %v237, %v325
    %327 = vmatmul.f32.gmra.mxu0 %v259
    %v328 = vpop.f32.mrf.mxu0
    %v329 = vadd.f32 %v242, %v328
    %330 = vmatmul.f32.gmra.mxu0 %v262
    %v331 = vpop.f32.mrf.mxu0
    %v332 = vadd.f32 %v247, %v331
    %333 = vmatmul.f32.gmra.mxu0 %v265
    %v334 = vpop.f32.mrf.mxu0
    %v335 = vadd.f32 %v252, %v334
    %336 = vdwg.mxu0
    %vm337 = vcmp.gt.f32.partialorder %v326, 0.0
    %vm338 = vcmp.gt.f32.partialorder %v329, 0.0
    %vm339 = vcmp.gt.f32.partialorder %v332, 0.0
    %vm340 = vcmp.gt.f32.partialorder %v335, 0.0
    %v341 = vmul.f32 %v326, 0.2
    %v342 = vmul.f32 %v329, 0.2
    %v343 = vmul.f32 %v332, 0.2
    %v344 = vmul.f32 %v335, 0.2
    %v345 = vsel %vm337, %v326, %v341
    %v346 = vsel %vm338, %v329, %v342
    %v347 = vsel %vm339, %v332, %v343
    %v348 = vsel %vm340, %v335, %v344
    %v349 = vld [vmem:[%s7] sm:$0x1]
    %v350 = vld [vmem:[#allocation2] sm:$0x1]
    %352 = vset.pattern.permute.xlu0 0
    %353 = vperm.xlu0 %352, %v350
    %v354 = vpop.permute.xlu0 %353
    %v356 = vperm.slane %v354, 0
    %v358 = vsel %vm254, %v349, 0
    %360 = vmatpush.msra.mxu0 0.0
    %361 = vmatpush.msra.mxu0 0.0
    %362 = vmatpush.msra.mxu0 0.0
    %363 = vmatpush.msra.mxu0 0.0
    %364 = vmatpush.msra.mxu0 0.0
    %365 = vmatpush.msra.mxu0 0.0
    %366 = vmatpush.msra.mxu0 0.0
    %367 = vmatpush.msra.mxu0 0.0
    %368 = vmatpush.msra.mxu0 0.0
    %369 = vmatpush.msra.mxu0 0.0
    %370 = vmatpush.msra.mxu0 0.0
    %371 = vmatpush.msra.mxu0 0.0
    %372 = vmatpush.msra.mxu0 %v155
    %373 = vmatpush.msra.mxu0 %v152
    %374 = vmatpush.msra.mxu0 %v149
    %375 = vmatpush.msra.mxu0 %v146
    %376 = vmatmul.f32.gmra.mxu0 %v358
    %v377 = vpop.f32.mrf.mxu0
    %v378 = vadd.f32 %v356, %v377
    %379 = vdwg.mxu0
    %v380 = vld [vmem:[%s9] sm:$0x1]
    %v381 = vld [vmem:[#allocation3] sm:$0x1]
    %383 = vset.pattern.permute.xlu0 0
    %384 = vperm.xlu0 %383, %v381
    %v385 = vpop.permute.xlu0 %384
    %v387 = vperm.slane %v385, 0
    %v389 = vsel %vm254, %v380, 0
    %391 = vmatpush.msra.mxu0 0.0
    %392 = vmatpush.msra.mxu0 0.0
    %393 = vmatpush.msra.mxu0 0.0
    %394 = vmatpush.msra.mxu0 0.0
    %395 = vmatpush.msra.mxu0 0.0
    %396 = vmatpush.msra.mxu0 0.0
    %397 = vmatpush.msra.mxu0 0.0
    %398 = vmatpush.msra.mxu0 0.0
    %399 = vmatpush.msra.mxu0 0.0
    %400 = vmatpush.msra.mxu0 0.0
    %401 = vmatpush.msra.mxu0 0.0
    %402 = vmatpush.msra.mxu0 0.0
    %403 = vmatpush.msra.mxu0 %v307
    %404 = vmatpush.msra.mxu0 %v306
    %405 = vmatpush.msra.mxu0 %v305
    %406 = vmatpush.msra.mxu0 %v304
    %407 = vmatmul.f32.gmra.mxu0 %v389
    %v408 = vpop.f32.mrf.mxu0
    %v409 = vadd.f32 %v387, %v408
    %410 = vdwg.mxu0
    %411 = vmatpush.msra.mxu0 0.0
    %412 = vmatpush.msra.mxu0 0.0
    %413 = vmatpush.msra.mxu0 0.0
    %414 = vmatpush.msra.mxu0 0.0
    %415 = vmatpush.msra.mxu0 0.0
    %416 = vmatpush.msra.mxu0 0.0
    %417 = vmatpush.msra.mxu0 0.0
    %418 = vmatpush.msra.mxu0 0.0
    %419 = vmatpush.msra.mxu0 0.0
    %420 = vmatpush.msra.mxu0 0.0
    %421 = vmatpush.msra.mxu0 0.0
    %422 = vmatpush.msra.mxu0 0.0
    %423 = vmatpush.msra.mxu0 %v348
    %424 = vmatpush.msra.mxu0 %v347
    %425 = vmatpush.msra.mxu0 %v346
    %426 = vmatpush.msra.mxu0 %v345
    %427 = vmatmul.f32.gmra.mxu0 %v389
    %v428 = vpop.f32.mrf.mxu0
    %v429 = vadd.f32 %v387, %v428
    %430 = vdwg.mxu0
    %v431 = vld [vmem:[%s2] sm:$0x1]
    %v432 = vsub.f32 1.0, %v431
    %v433 = vmul.f32 %v432, 0.99
    %v434 = vmul.f32 %v433, %v429
    %v435 = vadd.f32 %v378, %v434
    %v436 = vsub.f32 %v435, %v409
    %vm437 = vcmask 57344
    %438 = vst.msk [vmem:[#allocation4] sm:$0x1] %vm437, %v436
    // Predicated region
    $region46: #{tpu_custom_call.1} parent=1 // pred_check
      _
    $region47: #{tpu_custom_call.1} parent=1 // pred_check_branch
      %440 = sbr.rel (0) target = $region49
    $region48: #{tpu_custom_call.1} parent=1 // pred_region
      %442 = vsyncadd [#allocation5], 0
      %s444 = sshll.u32 [#allocation4], 4
      %s445 = int_to_ptr.vmem [resolvable:$true] %s444
      %s446 = sshll.u32 %s11, 4
      %s447 = int_to_ptr.hbm [resolvable:$true] %s446
      %449 = dma.vmem_to_hbm [thread:$0]  %s445, 16, %s447, [#allocation5]
    $region49: #{tpu_custom_call.1} parent=1 // pred_fallthru
      _
    // Predicated region
    $region50: #{tpu_custom_call.1} parent=1 // pred_check
      _
    $region51: #{tpu_custom_call.1} parent=1 // pred_check_branch
      %451 = sbr.rel (0) target = $region53
    $region52: #{tpu_custom_call.1} parent=1 // pred_region
      %453 = dma.done [#allocation5], 16
    $region53: #{tpu_custom_call.1} parent=1 // pred_fallthru
      _
    %454 = vsyncpa [#allocation5], 1

</llo_original>
